<compile_context>
chip_gen: v5e
topology: v5e:2x2
jax: 0.10.0
libtpu: 0.0.40
codegen_flags: <defaults>
</compile_context>

<pallas_src>
import jax
import jax.numpy as jnp
from jax.experimental import pallas as pl
from jax.experimental.pallas import tpu as pltpu


def _round_up(n, m):
    return ((n + m - 1) // m) * m


def _cdiv(a, b):
    return -(-a // b)


def _choose_tile(batch, *, min_tile=512, max_tile=8192, target_steps=8):
    """Pick a lane-dense batch tile (multiple of 128 lanes).

    Aims for ~target_steps grid steps, clamped to [min_tile, max_tile], with
    >=2 steps whenever the batch spans >=2 lane groups (v7x has 2 TensorCores
    and shards the "parallel" grid axis across them), preferring an even step
    count for 2-core load balance.
    """
    lanes = _round_up(max(batch, 1), 128)
    if lanes <= 128:
        return 128
    tb = _round_up(_cdiv(lanes, target_steps), 128)
    tb = max(min(tb, max_tile), min_tile)
    tb = min(tb, _round_up(_cdiv(lanes, 2), 128))   # guarantee >=2 grid steps
    steps = _cdiv(lanes, tb)
    if steps > 2 and steps % 2:                      # prefer an even step count
        tb_alt = _round_up(_cdiv(lanes, steps + 1), 128)
        if tb_alt >= min(min_tile, tb):
            tb = tb_alt
    return max(tb, 128)


def mlp_kernel(x_ref, w1_ref, b1_ref, w2_ref, b2_ref, w3_ref, b3_ref, o_ref):
    # Lane-dense compute layout: batch on the lane (last) axis.
    #   x_ref : (fin, TB)  bf16
    #   w*_ref: (out, in)  bf16 (torch-native orientation), VMEM-resident
    #   b*_ref: (out, 1)   f32, lane-broadcast adds on the f32 MXU accumulator
    h1 = jnp.dot(w1_ref[...], x_ref[...],
                 preferred_element_type=jnp.float32) + b1_ref[...]
    h1 = jnp.maximum(h1, 0.0).astype(jnp.bfloat16)

    h2 = jnp.dot(w2_ref[...], h1,
                 preferred_element_type=jnp.float32) + b2_ref[...]
    h2 = jnp.maximum(h2, 0.0).astype(jnp.bfloat16)

    out = jnp.dot(w3_ref[...], h2,
                  preferred_element_type=jnp.float32) + b3_ref[...]
    o_ref[...] = out.astype(o_ref.dtype)


def simple_model_forward(x, params, *, batch_tile=None, out_dtype=jnp.float32):
    """Fused MLP forward. x: (B, 4) float32; params in torch (out,in)/(out,) layout.

    out_dtype=jnp.bfloat16 halves the output writeback if the consumer
    tolerates it (per-review v6e option); default keeps the module's f32.
    """
    w1, b1, w2, b2, w3, b3 = params
    B, fin = x.shape
    fout = w3.shape[0]

    if batch_tile is None:
        tb = _choose_tile(B)
    else:
        tb = max(128, _round_up(int(batch_tile), 128))
    b_pad = _round_up(max(B, 1), tb)
    grid = (b_pad // tb,)

    # Single fused layout pass (the f32->bf16 cast has to read x once anyway):
    # (B, fin) f32 -> (fin, b_pad) bf16 with zero-padded batch columns.
    xt = jnp.transpose(x).astype(jnp.bfloat16)
    if b_pad != B:
        xt = jnp.pad(xt, ((0, 0), (0, b_pad - B)))

    w1b, w2b, w3b = (w.astype(jnp.bfloat16) for w in (w1, w2, w3))
    b1c = b1.astype(jnp.float32).reshape(-1, 1)
    b2c = b2.astype(jnp.float32).reshape(-1, 1)
    b3c = b3.astype(jnp.float32).reshape(-1, 1)

    flops = 2 * b_pad * (w1.size + w2.size + w3.size)
    bytes_accessed = (2 * (xt.size + w1b.size + w2b.size + w3b.size)
                      + 4 * (b1c.size + b2c.size + b3c.size)
                      + jnp.dtype(out_dtype).itemsize * fout * b_pad)

    const = lambda i: (0, 0)   # VMEM-resident operands: fetched once, never re-DMA'd
    out_t = pl.pallas_call(
        mlp_kernel,
        out_shape=jax.ShapeDtypeStruct((fout, b_pad), out_dtype),
        grid=grid,
        in_specs=[
            pl.BlockSpec((fin, tb), lambda i: (0, i)),    # lane-dense x tile
            pl.BlockSpec(w1b.shape, const),
            pl.BlockSpec(b1c.shape, const),
            pl.BlockSpec(w2b.shape, const),
            pl.BlockSpec(b2c.shape, const),
            pl.BlockSpec(w3b.shape, const),
            pl.BlockSpec(b3c.shape, const),
        ],
        out_specs=pl.BlockSpec((fout, tb), lambda i: (0, i)),   # lane-dense output
        compiler_params=pltpu.CompilerParams(
            dimension_semantics=("parallel",)),
        cost_estimate=pl.CostEstimate(
            flops=int(flops), transcendentals=0,
            bytes_accessed=int(bytes_accessed)),
    )(xt, w1b, b1c, w2b, b2c, w3b, b3c)

    # Only the tiny 3-wide output stream gets a wrapper-side transpose back to
    # the module's (B, 3) contract.
    return out_t[:, :B].T


def init_params(key, input_features=4, hidden_layer1=25, hidden_layer2=30,
                output_features=3):
    """nn.Linear-style init: W (out, in), b (out,), U(-1/sqrt(fan_in), +1/sqrt(fan_in))."""
    ks = jax.random.split(key, 6)

    def linear(kw, kb, fan_in, fan_out):
        bound = 1.0 / float(fan_in) ** 0.5
        w = jax.random.uniform(kw, (fan_out, fan_in), jnp.float32, -bound, bound)
        b = jax.random.uniform(kb, (fan_out,), jnp.float32, -bound, bound)
        return w, b

    w1, b1 = linear(ks[0], ks[1], input_features, hidden_layer1)
    w2, b2 = linear(ks[2], ks[3], hidden_layer1, hidden_layer2)
    w3, b3 = linear(ks[4], ks[5], hidden_layer2, output_features)
    return (w1, b1, w2, b2, w3, b3)


def reference_forward(x, params):
    w1, b1, w2, b2, w3, b3 = params
    h = jnp.maximum(x @ w1.T + b1, 0.0)
    h = jnp.maximum(h @ w2.T + b2, 0.0)
    return h @ w3.T + b3


if __name__ == "__main__":
    key = jax.random.PRNGKey(0)
    k_x, k_p = jax.random.split(key)
    params = init_params(k_p)

    forward = jax.jit(simple_model_forward)   # lets XLA fuse the transpose+cast+pad pass

    # Small shapes consistent with the module (Linear expects 4 input features).
    # batch=8 exercises the single-tile path; batch=300 exercises a
    # non-multiple-of-128 batch with a 2-step grid (both v7x cores busy) and
    # batch padding that the wrapper slices off.
    for batch in (8, 300):
        kx = jax.random.fold_in(k_x, batch)
        x = jax.random.normal(kx, (batch, 4), dtype=jnp.float32)
        out = jax.block_until_ready(forward(x, params))
        ref = reference_forward(x, params)
        assert out.shape == (batch, 3), out.shape
        # Tolerance reflects the deliberate bf16 narrowing of the DMA'd x and
        # weights (f32 MXU accumulation); the fp32 reference is exact.
        assert jnp.allclose(out, ref, atol=4e-2, rtol=4e-2), "mismatch vs reference"

    print("KERNEL_OK")
</pallas_src>

<mosaic_0001>
module attributes {stable_mosaic.version = 11 : i64} {
  func.func @mlp_kernel(%arg0: i32, %arg1: memref<4x128xbf16, #tpu.memory_space<vmem>>, %arg2: memref<25x4xbf16, #tpu.memory_space<vmem>>, %arg3: memref<25x1xf32, #tpu.memory_space<vmem>>, %arg4: memref<30x25xbf16, #tpu.memory_space<vmem>>, %arg5: memref<30x1xf32, #tpu.memory_space<vmem>>, %arg6: memref<3x30xbf16, #tpu.memory_space<vmem>>, %arg7: memref<3x1xf32, #tpu.memory_space<vmem>>, %arg8: memref<3x128xf32, #tpu.memory_space<vmem>>) attributes {dimension_semantics = [#tpu.dimension_semantics<parallel>], iteration_bounds = array<i64: 1>, scalar_prefetch = 0 : i64, scratch_operands = 0 : i64, tpu.core_type = #tpu.core_type<tc>, window_params = [{transform_indices = @transform_0, window_bounds = array<i64: 4, 128>}, {pipeline_mode = #tpu.pipeline_mode<synchronous>, transform_indices = @transform_1, window_bounds = array<i64: 25, 4>}, {pipeline_mode = #tpu.pipeline_mode<synchronous>, transform_indices = @transform_2, window_bounds = array<i64: 25, 1>}, {pipeline_mode = #tpu.pipeline_mode<synchronous>, transform_indices = @transform_3, window_bounds = array<i64: 30, 25>}, {pipeline_mode = #tpu.pipeline_mode<synchronous>, transform_indices = @transform_4, window_bounds = array<i64: 30, 1>}, {pipeline_mode = #tpu.pipeline_mode<synchronous>, transform_indices = @transform_5, window_bounds = array<i64: 3, 30>}, {pipeline_mode = #tpu.pipeline_mode<synchronous>, transform_indices = @transform_6, window_bounds = array<i64: 3, 1>}, {transform_indices = @transform_7, window_bounds = array<i64: 3, 128>}]} {
    %c0 = arith.constant 0 : index
    %c0_0 = arith.constant 0 : index
    %0 = vector.load %arg2[%c0, %c0_0] : memref<25x4xbf16, #tpu.memory_space<vmem>>, vector<25x4xbf16>
    %c0_1 = arith.constant 0 : index
    %c0_2 = arith.constant 0 : index
    %1 = vector.load %arg1[%c0_1, %c0_2] : memref<4x128xbf16, #tpu.memory_space<vmem>>, vector<4x128xbf16>
    %cst = arith.constant dense<0.000000e+00> : vector<25x128xf32>
    %2 = tpu.matmul %0, %1, %cst {dimension_numbers = #tpu.dot_dimension_numbers<[1], [0], [0], [1], [0, 0, 1, 1], [], []>} : vector<25x4xbf16>, vector<4x128xbf16>, vector<25x128xf32> -> vector<25x128xf32>
    %c0_3 = arith.constant 0 : index
    %c0_4 = arith.constant 0 : index
    %3 = vector.load %arg3[%c0_3, %c0_4] : memref<25x1xf32, #tpu.memory_space<vmem>>, vector<25x1xf32>
    %4 = vector.broadcast %3 : vector<25x1xf32> to vector<25x128xf32>
    %5 = arith.addf %2, %4 : vector<25x128xf32>
    %cst_5 = arith.constant 0.000000e+00 : f32
    %6 = vector.broadcast %cst_5 : f32 to vector<25x128xf32>
    %7 = arith.maximumf %5, %6 : vector<25x128xf32>
    %8 = arith.truncf %7 : vector<25x128xf32> to vector<25x128xbf16>
    %c0_6 = arith.constant 0 : index
    %c0_7 = arith.constant 0 : index
    %9 = vector.load %arg4[%c0_6, %c0_7] : memref<30x25xbf16, #tpu.memory_space<vmem>>, vector<30x25xbf16>
    %cst_8 = arith.constant dense<0.000000e+00> : vector<30x128xf32>
    %10 = tpu.matmul %9, %8, %cst_8 {dimension_numbers = #tpu.dot_dimension_numbers<[1], [0], [0], [1], [0, 0, 1, 1], [], []>} : vector<30x25xbf16>, vector<25x128xbf16>, vector<30x128xf32> -> vector<30x128xf32>
    %c0_9 = arith.constant 0 : index
    %c0_10 = arith.constant 0 : index
    %11 = vector.load %arg5[%c0_9, %c0_10] : memref<30x1xf32, #tpu.memory_space<vmem>>, vector<30x1xf32>
    %12 = vector.broadcast %11 : vector<30x1xf32> to vector<30x128xf32>
    %13 = arith.addf %10, %12 : vector<30x128xf32>
    %cst_11 = arith.constant 0.000000e+00 : f32
    %14 = vector.broadcast %cst_11 : f32 to vector<30x128xf32>
    %15 = arith.maximumf %13, %14 : vector<30x128xf32>
    %16 = arith.truncf %15 : vector<30x128xf32> to vector<30x128xbf16>
    %c0_12 = arith.constant 0 : index
    %c0_13 = arith.constant 0 : index
    %17 = vector.load %arg6[%c0_12, %c0_13] : memref<3x30xbf16, #tpu.memory_space<vmem>>, vector<3x30xbf16>
    %cst_14 = arith.constant dense<0.000000e+00> : vector<3x128xf32>
    %18 = tpu.matmul %17, %16, %cst_14 {dimension_numbers = #tpu.dot_dimension_numbers<[1], [0], [0], [1], [0, 0, 1, 1], [], []>} : vector<3x30xbf16>, vector<30x128xbf16>, vector<3x128xf32> -> vector<3x128xf32>
    %c0_15 = arith.constant 0 : index
    %c0_16 = arith.constant 0 : index
    %19 = vector.load %arg7[%c0_15, %c0_16] : memref<3x1xf32, #tpu.memory_space<vmem>>, vector<3x1xf32>
    %20 = vector.broadcast %19 : vector<3x1xf32> to vector<3x128xf32>
    %21 = arith.addf %18, %20 : vector<3x128xf32>
    %c0_17 = arith.constant 0 : index
    %c0_18 = arith.constant 0 : index
    %22 = vector.load %arg8[%c0_17, %c0_18] : memref<3x128xf32, #tpu.memory_space<vmem>>, vector<3x128xf32>
    tpu.vector_store %arg8[%c0_17, %c0_18], %21 {strides = array<i32>} : memref<3x128xf32, #tpu.memory_space<vmem>>, vector<3x128xf32>,
    return
  }
  func.func @transform_0(%arg0: i32) -> (i32, i32) {
    %c0_i32 = arith.constant 0 : i32
    %c0_i32_0 = arith.constant 0 : i32
    return %c0_i32, %arg0 : i32, i32
  }
  func.func @transform_1(%arg0: i32) -> (i32, i32) {
    %c0_i32 = arith.constant 0 : i32
    %c0_i32_0 = arith.constant 0 : i32
    %c0_i32_1 = arith.constant 0 : i32
    return %c0_i32, %c0_i32_0 : i32, i32
  }
  func.func @transform_2(%arg0: i32) -> (i32, i32) {
    %c0_i32 = arith.constant 0 : i32
    %c0_i32_0 = arith.constant 0 : i32
    %c0_i32_1 = arith.constant 0 : i32
    return %c0_i32, %c0_i32_0 : i32, i32
  }
  func.func @transform_3(%arg0: i32) -> (i32, i32) {
    %c0_i32 = arith.constant 0 : i32
    %c0_i32_0 = arith.constant 0 : i32
    %c0_i32_1 = arith.constant 0 : i32
    return %c0_i32, %c0_i32_0 : i32, i32
  }
  func.func @transform_4(%arg0: i32) -> (i32, i32) {
    %c0_i32 = arith.constant 0 : i32
    %c0_i32_0 = arith.constant 0 : i32
    %c0_i32_1 = arith.constant 0 : i32
    return %c0_i32, %c0_i32_0 : i32, i32
  }
  func.func @transform_5(%arg0: i32) -> (i32, i32) {
    %c0_i32 = arith.constant 0 : i32
    %c0_i32_0 = arith.constant 0 : i32
    %c0_i32_1 = arith.constant 0 : i32
    return %c0_i32, %c0_i32_0 : i32, i32
  }
  func.func @transform_6(%arg0: i32) -> (i32, i32) {
    %c0_i32 = arith.constant 0 : i32
    %c0_i32_0 = arith.constant 0 : i32
    %c0_i32_1 = arith.constant 0 : i32
    return %c0_i32, %c0_i32_0 : i32, i32
  }
  func.func @transform_7(%arg0: i32) -> (i32, i32) {
    %c0_i32 = arith.constant 0 : i32
    %c0_i32_0 = arith.constant 0 : i32
    return %c0_i32, %arg0 : i32, i32
  }
}

</mosaic_0001>

<llo_original>
// kernel: simple_model_forward.1
$region0: #{simple_model_forward.1}
  #allocation0 [shape = 'u32[]', space=smem, size = 0x4, offset = 0x4, fixed_abs, tag = 'smem constant byte address 0x4 - core index']
  #allocation1 [shape = 'u32[72,128]{1,0:T(1,128)}', space=vmem, size = 0x9000, scoped, tag = 'internal scratch']
  %s0 = inlined_call_operand.vmem [shape: bf16[4,128], index: 0, kind: input, shape index: {}]
  %s1 = inlined_call_operand.vmem [shape: bf16[25,4], index: 1, kind: input, shape index: {}]
  %s2 = inlined_call_operand.vmem [shape: f32[25,1], index: 2, kind: input, shape index: {}]
  %s3 = inlined_call_operand.vmem [shape: bf16[30,25], index: 3, kind: input, shape index: {}]
  %s4 = inlined_call_operand.vmem [shape: f32[30,1], index: 4, kind: input, shape index: {}]
  %s5 = inlined_call_operand.vmem [shape: bf16[3,30], index: 5, kind: input, shape index: {}]
  %s6 = inlined_call_operand.vmem [shape: f32[3,1], index: 6, kind: input, shape index: {}]
  %s7 = inlined_call_operand.vmem [shape: f32[3,128], index: 7, kind: output, shape index: {}]
  %s8 = sld [smem:[#allocation0]]
  $region38: #{simple_model_forward.1} parent=0
    _
  %s10 = ssub.s32 1, %s8
  %s11 = scalar_select 0, %s10, %s8
  // Predicated region
  $region2: #{simple_model_forward.1} parent=0 // pred_check
    _
  $region3: #{simple_model_forward.1} parent=0 // pred_check_branch
    %13 = sbr.rel (0) target = $region5
  $region4: #{simple_model_forward.1} parent=0 // pred_region
    _
  $region5: #{simple_model_forward.1} parent=0 // pred_fallthru
    _
  // Predicated region
  $region6: #{simple_model_forward.1} parent=0 // pred_check
    _
  $region7: #{simple_model_forward.1} parent=0 // pred_check_branch
    %15 = sbr.rel (0) target = $region9
  $region8: #{simple_model_forward.1} parent=0 // pred_region
    _
  $region9: #{simple_model_forward.1} parent=0 // pred_fallthru
    _
  // Predicated region
  $region10: #{simple_model_forward.1} parent=0 // pred_check
    _
  $region11: #{simple_model_forward.1} parent=0 // pred_check_branch
    %17 = sbr.rel (0) target = $region13
  $region12: #{simple_model_forward.1} parent=0 // pred_region
    _
  $region13: #{simple_model_forward.1} parent=0 // pred_fallthru
    _
  // Predicated region
  $region14: #{simple_model_forward.1} parent=0 // pred_check
    _
  $region15: #{simple_model_forward.1} parent=0 // pred_check_branch
    %19 = sbr.rel (0) target = $region17
  $region16: #{simple_model_forward.1} parent=0 // pred_region
    _
  $region17: #{simple_model_forward.1} parent=0 // pred_fallthru
    _
  // Predicated region
  $region18: #{simple_model_forward.1} parent=0 // pred_check
    _
  $region19: #{simple_model_forward.1} parent=0 // pred_check_branch
    %21 = sbr.rel (0) target = $region21
  $region20: #{simple_model_forward.1} parent=0 // pred_region
    _
  $region21: #{simple_model_forward.1} parent=0 // pred_fallthru
    _
  // Predicated region
  $region22: #{simple_model_forward.1} parent=0 // pred_check
    _
  $region23: #{simple_model_forward.1} parent=0 // pred_check_branch
    %23 = sbr.rel (0) target = $region25
  $region24: #{simple_model_forward.1} parent=0 // pred_region
    _
  $region25: #{simple_model_forward.1} parent=0 // pred_fallthru
    _
  // Predicated region
  $region26: #{simple_model_forward.1} parent=0 // pred_check
    _
  $region27: #{simple_model_forward.1} parent=0 // pred_check_branch
    %25 = sbr.rel (0) target = $region29
  $region28: #{simple_model_forward.1} parent=0 // pred_region
    _
  $region29: #{simple_model_forward.1} parent=0 // pred_fallthru
    _
  %v27 = vld [vmem:[%s1] sm:$0xf]
  %v28 = vld [vmem:[%s1 + $0x4] sm:$0xf]
  %v29 = vld [vmem:[%s1 + $0x8] sm:$0xf]
  %v30 = vld [vmem:[%s1 + $0xc] sm:$0x1]
  %v31 = vld [vmem:[%s0] sm:$0x3]
  %v32 = vld [vmem:[%s2] sm:$0xff]
  %v33 = vld [vmem:[%s2 + $0x8] sm:$0xff]
  %v34 = vld [vmem:[%s2 + $0x10] sm:$0xff]
  %v35 = vld [vmem:[%s2 + $0x18] sm:$0x1]
  %37 = vset.pattern.permute.xlu0 0
  %38 = vperm.xlu0 %37, %v32
  %v39 = vpop.permute.xlu0 %38
  %42 = vset.pattern.permute.xlu0 0
  %43 = vperm.xlu0 %42, %v33
  %v44 = vpop.permute.xlu0 %43
  %47 = vset.pattern.permute.xlu0 0
  %48 = vperm.xlu0 %47, %v34
  %v49 = vpop.permute.xlu0 %48
  %52 = vset.pattern.permute.xlu0 0
  %53 = vperm.xlu0 %52, %v35
  %v54 = vpop.permute.xlu0 %53
  %v60 = vunpack.c.l.b16 %v27
  %v61 = vunpack.c.l.b16 %v28
  %v62 = vunpack.c.l.b16 %v29
  %v63 = vunpack.c.l.b16 %v30
  %v64 = vpack.c.b16 %v61, %v60
  %v65 = vpack.c.b16 %v63, %v62
  %vm66 = vcmask 31744
  %v68 = vsel %vm66, %v64, 0
  %v71 = vsel %vm66, %v65, 0
  %vm73 = vcmask 1041408
  %v75 = vsel %vm73, %v31, 0
  %77 = vmatpush.bf16.msra.mxu0 0
  %78 = vmatpush.bf16.msra.mxu0 0
  %79 = vmatpush.bf16.msra.mxu0 0
  %80 = vmatpush.bf16.msra.mxu0 0
  %81 = vmatpush.bf16.msra.mxu0 0
  %82 = vmatpush.bf16.msra.mxu0 0
  %83 = vmatpush.bf16.msra.mxu0 0
  %84 = vmatpush.bf16.msra.mxu0 %v75
  %85 = vmatmul.bf16.gmra.mxu0 %v68
  %v86 = vpop.f32.mrf.mxu0
  %v87 = vadd.f32 %v39, %v86
  %v88 = vpop.f32.mrf.mxu0
  %v89 = vadd.f32 %v44, %v88
  %90 = vmatmul.bf16.gmra.mxu0 %v71
  %v91 = vpop.f32.mrf.mxu0
  %v92 = vadd.f32 %v49, %v91
  %v93 = vpop.f32.mrf.mxu0
  %v94 = vadd.f32 %v54, %v93
  %95 = vdwg.mxu0
  %v96 = vmax.f32 %v87, 0.0
  %v97 = vmax.f32 %v89, 0.0
  %v98 = vmax.f32 %v92, 0.0
  %v99 = vmax.f32 %v94, 0.0
  %v100 = vpack.c.bf16 %v97, %v96
  %v101 = vpack.c.bf16 %v99, %v98
  %v102 = vld [vmem:[%s3] sm:$0xf]
  %v103 = vld [vmem:[%s3 + $0x4] sm:$0xf]
  %v104 = vld [vmem:[%s3 + $0x8] sm:$0xf]
  %v105 = vld [vmem:[%s3 + $0xc] sm:$0x7]
  %v106 = vld [vmem:[%s4] sm:$0xff]
  %v107 = vld [vmem:[%s4 + $0x8] sm:$0xff]
  %v108 = vld [vmem:[%s4 + $0x10] sm:$0xff]
  %v109 = vld [vmem:[%s4 + $0x18] sm:$0x3f]
  %111 = vset.pattern.permute.xlu0 0
  %112 = vperm.xlu0 %111, %v106
  %v113 = vpop.permute.xlu0 %112
  %116 = vset.pattern.permute.xlu0 0
  %117 = vperm.xlu0 %116, %v107
  %v118 = vpop.permute.xlu0 %117
  %121 = vset.pattern.permute.xlu0 0
  %122 = vperm.xlu0 %121, %v108
  %v123 = vpop.permute.xlu0 %122
  %126 = vset.pattern.permute.xlu0 0
  %127 = vperm.xlu0 %126, %v109
  %v128 = vpop.permute.xlu0 %127
  %v134 = vunpack.c.l.b16 %v102
  %v135 = vunpack.c.l.b16 %v103
  %v136 = vunpack.c.l.b16 %v104
  %v137 = vunpack.c.l.b16 %v105
  %v138 = vpack.c.b16 %v135, %v134
  %v139 = vpack.c.b16 %v137, %v136
  %vm140 = vcmask 203776
  %v142 = vsel %vm140, %v138, 0
  %v145 = vsel %vm140, %v139, 0
  %vm147 = vcmask 1043456
  %vm148 = vcmask 1044480
  %v149 = vsel %vm147, 4294967295, 65535
  %v150 = vsel %vm148, %v149, 0
  %v152 = vand.u32 %v101, %v150
  %154 = vmatpush.bf16.msra.mxu0 0
  %155 = vmatpush.bf16.msra.mxu0 0
  %156 = vmatpush.bf16.msra.mxu0 0
  %157 = vmatpush.bf16.msra.mxu0 0
  %158 = vmatpush.bf16.msra.mxu0 0
  %159 = vmatpush.bf16.msra.mxu0 0
  %160 = vmatpush.bf16.msra.mxu0 %v152
  %161 = vmatpush.bf16.msra.mxu0 %v100
  %162 = vmatmul.bf16.gmra.mxu0 %v142
  %v163 = vpop.f32.mrf.mxu0
  %v164 = vadd.f32 %v113, %v163
  %v165 = vpop.f32.mrf.mxu0
  %v166 = vadd.f32 %v118, %v165
  %167 = vmatmul.bf16.gmra.mxu0 %v145
  %v168 = vpop.f32.mrf.mxu0
  %v169 = vadd.f32 %v123, %v168
  %v170 = vpop.f32.mrf.mxu0
  %v171 = vadd.f32 %v128, %v170
  %172 = vdwg.mxu0
  %v173 = vmax.f32 %v164, 0.0
  %v174 = vmax.f32 %v166, 0.0
  %v175 = vmax.f32 %v169, 0.0
  %v176 = vmax.f32 %v171, 0.0
  %v177 = vpack.c.bf16 %v174, %v173
  %v178 = vpack.c.bf16 %v176, %v175
  %v179 = vld [vmem:[%s5] sm:$0x3]
  %v180 = vld [vmem:[%s6] sm:$0x7]
  %182 = vset.pattern.permute.xlu0 0
  %183 = vperm.xlu0 %182, %v180
  %v184 = vpop.permute.xlu0 %183
  %vm186 = vcmask 244736
  %v188 = vsel %vm186, %v179, 0
  %vm190 = vcmask 1046528
  %v192 = vsel %vm190, %v178, 0
  %194 = vmatpush.bf16.msra.mxu0 0
  %195 = vmatpush.bf16.msra.mxu0 0
  %196 = vmatpush.bf16.msra.mxu0 0
  %197 = vmatpush.bf16.msra.mxu0 0
  %198 = vmatpush.bf16.msra.mxu0 0
  %199 = vmatpush.bf16.msra.mxu0 0
  %200 = vmatpush.bf16.msra.mxu0 %v192
  %201 = vmatpush.bf16.msra.mxu0 %v177
  %202 = vmatmul.bf16.gmra.mxu0 %v188
  %v203 = vpop.f32.mrf.mxu0
  %v204 = vadd.f32 %v184, %v203
  %v205 = vpop.f32.mrf.mxu0
  %206 = vdwg.mxu0
  %207 = vst [vmem:[%s7] sm:$0x7] %v204
  // Predicated region
  $region30: #{simple_model_forward.1} parent=0 // pred_check
    _
  $region31: #{simple_model_forward.1} parent=0 // pred_check_branch
    %209 = sbr.rel (0) target = $region33
  $region32: #{simple_model_forward.1} parent=0 // pred_region
    _
  $region33: #{simple_model_forward.1} parent=0 // pred_fallthru
    _
  // Predicated region
  $region34: #{simple_model_forward.1} parent=0 // pred_check
    _
  $region35: #{simple_model_forward.1} parent=0 // pred_check_branch
    %211 = sbr.rel (0) target = $region37
  $region36: #{simple_model_forward.1} parent=0 // pred_region
    _
  $region37: #{simple_model_forward.1} parent=0 // pred_fallthru
    _

</llo_original>
